<compile_context>
chip_gen: v7x
topology: tpu7x:2x2x1
jax: 0.10.0
libtpu: 0.0.40
codegen_flags: <defaults>
</compile_context>

<pallas_src>
import functools
import math

import jax
import jax.numpy as jnp
from jax.experimental import pallas as pl
from jax.experimental.pallas import tpu as pltpu


# ---------------------------------------------------------------------------
# Fused Pallas kernel: one batch element per grid step, everything in VMEM.
# Layout inside the kernel: channels on sublanes / outer dim, flat H*W on lanes.
# ---------------------------------------------------------------------------
def _ghost_fused_kernel(x_ref, w1_ref, s1_ref, b1_ref, w2_ref, s2_ref, b2_ref,
                        o_ref, pad_ref, *, H, W, cinit, crep, oup, ratio):
    HW = H * W
    P = W + 1                       # flat halo width: covers every |shift| <= W+1

    # ---- primary 1x1 conv (+ folded BN + ReLU): bf16 MXU matmul, f32 accumulation ----
    xb = x_ref[...].astype(jnp.bfloat16)                                  # (Cin, HW)
    acc1 = jnp.dot(w1_ref[...], xb, preferred_element_type=jnp.float32)   # (cinit, HW)
    x1 = jnp.maximum(acc1 * s1_ref[...] + b1_ref[...], 0.0)

    # x1 goes straight into its output channel slice (lane-dense store, no concat temp)
    o_ref[:cinit, :] = x1.astype(o_ref.dtype)

    # ---- grouped-conv channel mapping: depthwise out channel j reads x1[j // (ratio-1)]
    k = ratio - 1
    x1_rep = x1 if k == 1 else jnp.repeat(x1, k, axis=0)
    # TODO(synk): for ratio > 2, a per-replica loop over the un-repeated x1 (with
    # replica-major reordered weights) would avoid this copy.

    # ---- flat zero-halo scratch: [P zeros | x1_rep | P zeros].
    # Only the two end strips are (re)zeroed each step (cheap, and safe when the
    # "parallel" batch axis is split across TensorCores); the interior is fully
    # rewritten every step, so nothing relies on scratch persistence.
    zeros_end = jnp.zeros((crep, P), jnp.float32)
    pad_ref[:, :P] = zeros_end
    pad_ref[:, P + HW:] = zeros_end
    pad_ref[:, P:P + HW] = x1_rep

    # Column-boundary masks (row boundaries are handled by the flat zero halo).
    col = jax.lax.broadcasted_iota(jnp.int32, (1, HW), 1) % W
    keep_l = col >= 1               # tap dx = -1 is invalid at w == 0
    keep_r = col <= W - 2           # tap dx = +1 is invalid at w == W-1

    # ---- cheap 3x3 depthwise conv (+ folded BN + ReLU): 9 shifted MACs on the VPU ----
    w2v = w2_ref[...]                                                     # (crep, 9)
    acc2 = jnp.zeros((crep, HW), jnp.float32)
    for dy in (-1, 0, 1):
        for dx in (-1, 0, 1):
            s = dy * W + dx
            tap = (dy + 1) * 3 + (dx + 1)
            shifted = pad_ref[:, P + s:P + s + HW]                        # static-offset slice
            if dx == -1:
                shifted = jnp.where(keep_l, shifted, 0.0)
            elif dx == 1:
                shifted = jnp.where(keep_r, shifted, 0.0)
            acc2 = acc2 + shifted * w2v[:, tap:tap + 1]
    x2 = jnp.maximum(acc2 * s2_ref[...] + b2_ref[...], 0.0)

    # ---- "concat + slice to oup" = direct store of the remaining output channels ----
    o_ref[cinit:oup, :] = x2[:oup - cinit].astype(o_ref.dtype)


# ---------------------------------------------------------------------------
# GhostModule forward (NCHW in / NCHW out, like the PyTorch module).
# The (N,C,H,W) <-> (N,C,H*W) reshapes are contiguous views (no HBM passes).
# ---------------------------------------------------------------------------
def ghost_module(x_nchw, params):
    N, Cin, H, W = x_nchw.shape
    cinit = params["init_channels"]
    crep = params["new_channels"]
    oup = params["oup"]
    ratio = params["ratio"]
    HW = H * W
    HWP = HW + 2 * (W + 1)

    x_flat = x_nchw.astype(jnp.float32).reshape(N, Cin, HW)
    w1_bf = params["w1"].astype(jnp.bfloat16)                 # (cinit, Cin)
    w2_flat = params["w2"].reshape(crep, 9)                   # (crep, 3, 3) -> (crep, 9)

    kernel = functools.partial(_ghost_fused_kernel, H=H, W=W, cinit=cinit,
                               crep=crep, oup=oup, ratio=ratio)

    # VMEM budget: double-buffered x/out blocks + halo scratch + in-kernel temporaries.
    est_bytes = 4 * (2 * Cin * HW + 2 * oup * HW + crep * HWP
                     + (2 * cinit + 6 * crep) * HW)
    vmem_limit = int(min(max(2 * est_bytes, 16 << 20), 64 << 20))

    # Advisory cost estimate for the XLA scheduler.
    flops = N * HW * (2 * Cin * cinit + 2 * 9 * crep + 4 * (cinit + crep))
    bytes_accessed = 4 * N * HW * (Cin + oup) + 2 * cinit * Cin + 4 * crep * 11 + 8 * cinit

    out_flat = pl.pallas_call(
        kernel,
        out_shape=jax.ShapeDtypeStruct((N, oup, HW), jnp.float32),
        grid=(N,),
        in_specs=[
            pl.BlockSpec((None, Cin, HW), lambda n: (n, 0, 0)),   # x (per-batch block)
            pl.BlockSpec((cinit, Cin), lambda n: (0, 0)),         # w1 (bf16)
            pl.BlockSpec((cinit, 1), lambda n: (0, 0)),           # scale1
            pl.BlockSpec((cinit, 1), lambda n: (0, 0)),           # bias1
            pl.BlockSpec((crep, 9), lambda n: (0, 0)),            # w2 (flattened 3x3 taps)
            pl.BlockSpec((crep, 1), lambda n: (0, 0)),            # scale2
            pl.BlockSpec((crep, 1), lambda n: (0, 0)),            # bias2
        ],
        out_specs=pl.BlockSpec((None, oup, HW), lambda n: (n, 0, 0)),
        scratch_shapes=[pltpu.VMEM((crep, HWP), jnp.float32)],
        compiler_params=pltpu.CompilerParams(
            dimension_semantics=("parallel",),
            vmem_limit_bytes=vmem_limit),
        cost_estimate=pl.CostEstimate(flops=flops, transcendentals=0,
                                      bytes_accessed=bytes_accessed),
    )(x_flat,
      w1_bf,
      params["scale1"].reshape(cinit, 1), params["bias1"].reshape(cinit, 1),
      w2_flat,
      params["scale2"].reshape(crep, 1), params["bias2"].reshape(crep, 1))

    return out_flat.reshape(N, oup, H, W)


# ---------------------------------------------------------------------------
# Parameter construction (deterministic, mirrors the PyTorch __init__ shapes)
# ---------------------------------------------------------------------------
def init_ghost_params(key, inp, oup, kernel_size=1, ratio=2, dw_size=3):
    assert kernel_size == 1 and dw_size == 3, "kernel implemented for the default config"
    assert ratio >= 2, "ratio=1 gives new_channels=0 (degenerate in the PyTorch module too)"
    init_channels = math.ceil(oup / ratio)
    new_channels = init_channels * (ratio - 1)
    ks = jax.random.split(key, 10)
    eps = 1e-5

    # primary 1x1 conv: PyTorch weight (init_channels, inp, 1, 1) -> (init_channels, inp)
    w1 = 0.3 * jax.random.normal(ks[0], (init_channels, inp), jnp.float32)
    g1 = jax.random.uniform(ks[1], (init_channels,), jnp.float32, 0.5, 1.5)
    b1 = 0.1 * jax.random.normal(ks[2], (init_channels,), jnp.float32)
    m1 = 0.1 * jax.random.normal(ks[3], (init_channels,), jnp.float32)
    v1 = jax.random.uniform(ks[4], (init_channels,), jnp.float32, 0.5, 1.5)
    scale1 = g1 / jnp.sqrt(v1 + eps)
    bias1 = b1 - m1 * scale1

    # cheap depthwise 3x3 conv: PyTorch weight (new_channels, 1, 3, 3) -> (new_channels, 3, 3)
    w2 = 0.3 * jax.random.normal(ks[5], (new_channels, 3, 3), jnp.float32)
    g2 = jax.random.uniform(ks[6], (new_channels,), jnp.float32, 0.5, 1.5)
    b2 = 0.1 * jax.random.normal(ks[7], (new_channels,), jnp.float32)
    m2 = 0.1 * jax.random.normal(ks[8], (new_channels,), jnp.float32)
    v2 = jax.random.uniform(ks[9], (new_channels,), jnp.float32, 0.5, 1.5)
    scale2 = g2 / jnp.sqrt(v2 + eps)
    bias2 = b2 - m2 * scale2

    return dict(
        w1=w1, scale1=scale1, bias1=bias1,
        w2=w2, scale2=scale2, bias2=bias2,
        init_channels=init_channels, new_channels=new_channels,
        oup=oup, ratio=ratio,
    )


# ---------------------------------------------------------------------------
# Pure-JAX reference (same math, same bf16 rounding of the 1x1 conv operands)
# ---------------------------------------------------------------------------
def ghost_module_ref(x_nchw, params):
    N, Cin, H, W = x_nchw.shape
    oup = params["oup"]
    ratio = params["ratio"]
    w1b = params["w1"].astype(jnp.bfloat16)
    xb = x_nchw.astype(jnp.float32).astype(jnp.bfloat16)
    x1 = jnp.einsum("dc,nchw->ndhw", w1b, xb, preferred_element_type=jnp.float32)
    x1 = jnp.maximum(x1 * params["scale1"][None, :, None, None]
                     + params["bias1"][None, :, None, None], 0.0)
    x1r = jnp.repeat(x1, ratio - 1, axis=1)
    xp = jnp.pad(x1r, ((0, 0), (0, 0), (1, 1), (1, 1)))
    acc = jnp.zeros_like(x1r)
    for ky in range(3):
        for kx in range(3):
            acc = acc + xp[:, :, ky:ky + H, kx:kx + W] * params["w2"][None, :, ky, kx, None, None]
    x2 = jnp.maximum(acc * params["scale2"][None, :, None, None]
                     + params["bias2"][None, :, None, None], 0.0)
    return jnp.concatenate([x1, x2], axis=1)[:, :oup]


if __name__ == "__main__":
    key = jax.random.PRNGKey(0)
    k_param, k_x = jax.random.split(key)

    inp, oup = 4, 8
    params = init_ghost_params(k_param, inp=inp, oup=oup)

    x = jax.random.normal(k_x, (2, inp, 16, 16), jnp.float32)   # NCHW, like PyTorch

    out = ghost_module(x, params)
    out = jax.block_until_ready(out)

    ref = jax.block_until_ready(ghost_module_ref(x, params))
    assert out.shape == (2, oup, 16, 16), out.shape
    err = float(jnp.max(jnp.abs(out - ref)))
    assert jnp.allclose(out, ref, atol=2e-3, rtol=2e-3), err

    print("KERNEL_OK")
</pallas_src>

<mosaic_0001>
module attributes {stable_mosaic.version = 11 : i64} {
  func.func @_ghost_fused_kernel(%arg0: i32, %arg1: memref<1x4x256xf32, #tpu.memory_space<vmem>>, %arg2: memref<4x4xbf16, #tpu.memory_space<vmem>>, %arg3: memref<4x1xf32, #tpu.memory_space<vmem>>, %arg4: memref<4x1xf32, #tpu.memory_space<vmem>>, %arg5: memref<4x9xf32, #tpu.memory_space<vmem>>, %arg6: memref<4x1xf32, #tpu.memory_space<vmem>>, %arg7: memref<4x1xf32, #tpu.memory_space<vmem>>, %arg8: memref<1x8x256xf32, #tpu.memory_space<vmem>>, %arg9: memref<4x290xf32, #tpu.memory_space<vmem>>) attributes {dimension_semantics = [#tpu.dimension_semantics<parallel>], iteration_bounds = array<i64: 2>, scalar_prefetch = 0 : i64, scratch_operands = 1 : i64, tpu.core_type = #tpu.core_type<tc>, window_params = [{transform_indices = @transform_0, window_bounds = array<i64: 1, 4, 256>}, {pipeline_mode = #tpu.pipeline_mode<synchronous>, transform_indices = @transform_1, window_bounds = array<i64: 4, 4>}, {pipeline_mode = #tpu.pipeline_mode<synchronous>, transform_indices = @transform_2, window_bounds = array<i64: 4, 1>}, {pipeline_mode = #tpu.pipeline_mode<synchronous>, transform_indices = @transform_3, window_bounds = array<i64: 4, 1>}, {pipeline_mode = #tpu.pipeline_mode<synchronous>, transform_indices = @transform_4, window_bounds = array<i64: 4, 9>}, {pipeline_mode = #tpu.pipeline_mode<synchronous>, transform_indices = @transform_5, window_bounds = array<i64: 4, 1>}, {pipeline_mode = #tpu.pipeline_mode<synchronous>, transform_indices = @transform_6, window_bounds = array<i64: 4, 1>}, {transform_indices = @transform_7, window_bounds = array<i64: 1, 8, 256>}]} {
    %c0 = arith.constant 0 : index
    %c0_0 = arith.constant 0 : index
    %c0_1 = arith.constant 0 : index
    %0 = vector.load %arg1[%c0, %c0_0, %c0_1] : memref<1x4x256xf32, #tpu.memory_space<vmem>>, vector<1x4x256xf32>
    %1 = vector.shape_cast %0 : vector<1x4x256xf32> to vector<4x256xf32>
    %2 = arith.truncf %1 : vector<4x256xf32> to vector<4x256xbf16>
    %c0_2 = arith.constant 0 : index
    %c0_3 = arith.constant 0 : index
    %3 = vector.load %arg2[%c0_2, %c0_3] : memref<4x4xbf16, #tpu.memory_space<vmem>>, vector<4x4xbf16>
    %cst = arith.constant dense<0.000000e+00> : vector<4x256xf32>
    %4 = tpu.matmul %3, %2, %cst {dimension_numbers = #tpu.dot_dimension_numbers<[1], [0], [0], [1], [0, 0, 1, 1], [], []>} : vector<4x4xbf16>, vector<4x256xbf16>, vector<4x256xf32> -> vector<4x256xf32>
    %c0_4 = arith.constant 0 : index
    %c0_5 = arith.constant 0 : index
    %5 = vector.load %arg3[%c0_4, %c0_5] : memref<4x1xf32, #tpu.memory_space<vmem>>, vector<4x1xf32>
    %6 = vector.broadcast %5 : vector<4x1xf32> to vector<4x256xf32>
    %7 = arith.mulf %4, %6 : vector<4x256xf32>
    %c0_6 = arith.constant 0 : index
    %c0_7 = arith.constant 0 : index
    %8 = vector.load %arg4[%c0_6, %c0_7] : memref<4x1xf32, #tpu.memory_space<vmem>>, vector<4x1xf32>
    %9 = vector.broadcast %8 : vector<4x1xf32> to vector<4x256xf32>
    %10 = arith.addf %7, %9 : vector<4x256xf32>
    %cst_8 = arith.constant 0.000000e+00 : f32
    %11 = vector.broadcast %cst_8 : f32 to vector<4x256xf32>
    %12 = arith.maximumf %10, %11 : vector<4x256xf32>
    %c0_9 = arith.constant 0 : index
    %c0_10 = arith.constant 0 : index
    %c0_11 = arith.constant 0 : index
    %13 = vector.load %arg8[%c0_9, %c0_10, %c0_11] : memref<1x8x256xf32, #tpu.memory_space<vmem>>, vector<1x4x256xf32>
    %14 = vector.shape_cast %13 : vector<1x4x256xf32> to vector<4x256xf32>
    %15 = vector.shape_cast %12 : vector<4x256xf32> to vector<1x4x256xf32>
    tpu.vector_store %arg8[%c0_9, %c0_10, %c0_11], %15 {strides = array<i32>} : memref<1x8x256xf32, #tpu.memory_space<vmem>>, vector<1x4x256xf32>,
    %cst_12 = arith.constant 0.000000e+00 : f32
    %16 = vector.broadcast %cst_12 : f32 to vector<4x17xf32>
    %c0_13 = arith.constant 0 : index
    %c0_14 = arith.constant 0 : index
    %17 = vector.load %arg9[%c0_13, %c0_14] : memref<4x290xf32, #tpu.memory_space<vmem>>, vector<4x17xf32>
    tpu.vector_store %arg9[%c0_13, %c0_14], %16 {strides = array<i32>} : memref<4x290xf32, #tpu.memory_space<vmem>>, vector<4x17xf32>,
    %c0_15 = arith.constant 0 : index
    %c273 = arith.constant 273 : index
    %18 = vector.load %arg9[%c0_15, %c273] : memref<4x290xf32, #tpu.memory_space<vmem>>, vector<4x17xf32>
    tpu.vector_store %arg9[%c0_15, %c273], %16 {strides = array<i32>} : memref<4x290xf32, #tpu.memory_space<vmem>>, vector<4x17xf32>,
    %c0_16 = arith.constant 0 : index
    %c17 = arith.constant 17 : index
    %19 = vector.load %arg9[%c0_16, %c17] : memref<4x290xf32, #tpu.memory_space<vmem>>, vector<4x256xf32>
    tpu.vector_store %arg9[%c0_16, %c17], %12 {strides = array<i32>} : memref<4x290xf32, #tpu.memory_space<vmem>>, vector<4x256xf32>,
    %20 = tpu.iota {dimensions = array<i32: 1>} : vector<1x256xi32>
    %c16_i32 = arith.constant 16 : i32
    %c0_i32 = arith.constant 0 : i32
    %21 = arith.cmpi eq, %c16_i32, %c0_i32 : i32
    %c1_i32 = arith.constant 1 : i32
    %22 = arith.select %21, %c1_i32, %c16_i32 : i32
    %23 = vector.broadcast %22 : i32 to vector<1x256xi32>
    %24 = arith.remsi %20, %23 : vector<1x256xi32>
    %c0_i32_17 = arith.constant 0 : i32
    %25 = vector.broadcast %c0_i32_17 : i32 to vector<1x256xi32>
    %26 = arith.cmpi ne, %24, %25 : vector<1x256xi32>
    %c0_i32_18 = arith.constant 0 : i32
    %27 = vector.broadcast %c0_i32_18 : i32 to vector<1x256xi32>
    %28 = arith.cmpi slt, %24, %27 : vector<1x256xi32>
    %c0_i32_19 = arith.constant 0 : i32
    %29 = arith.cmpi slt, %22, %c0_i32_19 : i32
    %30 = vector.broadcast %29 : i1 to vector<1x256xi1>
    %31 = vector.broadcast %30 : vector<1x256xi1> to vector<1x256xi1>
    %32 = arith.xori %28, %31 : vector<1x256xi1>
    %33 = arith.andi %32, %26 : vector<1x256xi1>
    %34 = vector.broadcast %22 : i32 to vector<1x256xi32>
    %35 = arith.addi %24, %34 : vector<1x256xi32>
    %36 = arith.select %33, %35, %24 : vector<1x256xi1>, vector<1x256xi32>
    %c1_i32_20 = arith.constant 1 : i32
    %37 = vector.broadcast %c1_i32_20 : i32 to vector<1x256xi32>
    %38 = arith.cmpi sge, %36, %37 : vector<1x256xi32>
    %c14_i32 = arith.constant 14 : i32
    %39 = vector.broadcast %c14_i32 : i32 to vector<1x256xi32>
    %40 = arith.cmpi sle, %36, %39 : vector<1x256xi32>
    %c0_21 = arith.constant 0 : index
    %c0_22 = arith.constant 0 : index
    %41 = vector.load %arg5[%c0_21, %c0_22] : memref<4x9xf32, #tpu.memory_space<vmem>>, vector<4x9xf32>
    %cst_23 = arith.constant 0.000000e+00 : f32
    %42 = vector.broadcast %cst_23 : f32 to vector<4x256xf32>
    %c0_24 = arith.constant 0 : index
    %c0_25 = arith.constant 0 : index
    %43 = vector.load %arg9[%c0_24, %c0_25] : memref<4x290xf32, #tpu.memory_space<vmem>>, vector<4x256xf32>
    %cst_26 = arith.constant 0.000000e+00 : f32
    %44 = vector.shape_cast %38 : vector<1x256xi1> to vector<1x256xi1>
    %45 = vector.broadcast %44 : vector<1x256xi1> to vector<4x256xi1>
    %46 = vector.broadcast %cst_26 : f32 to vector<4x256xf32>
    %47 = arith.select %45, %43, %46 : vector<4x256xi1>, vector<4x256xf32>
    %48 = vector.extract_strided_slice %41 {offsets = [0, 0], sizes = [4, 1], strides = [1, 1]} : vector<4x9xf32> to vector<4x1xf32>
    %49 = vector.broadcast %48 : vector<4x1xf32> to vector<4x256xf32>
    %50 = arith.mulf %47, %49 : vector<4x256xf32>
    %51 = arith.addf %42, %50 : vector<4x256xf32>
    %c0_27 = arith.constant 0 : index
    %c1 = arith.constant 1 : index
    %52 = vector.load %arg9[%c0_27, %c1] : memref<4x290xf32, #tpu.memory_space<vmem>>, vector<4x256xf32>
    %53 = vector.extract_strided_slice %41 {offsets = [0, 1], sizes = [4, 1], strides = [1, 1]} : vector<4x9xf32> to vector<4x1xf32>
    %54 = vector.broadcast %53 : vector<4x1xf32> to vector<4x256xf32>
    %55 = arith.mulf %52, %54 : vector<4x256xf32>
    %56 = arith.addf %51, %55 : vector<4x256xf32>
    %c0_28 = arith.constant 0 : index
    %c2 = arith.constant 2 : index
    %57 = vector.load %arg9[%c0_28, %c2] : memref<4x290xf32, #tpu.memory_space<vmem>>, vector<4x256xf32>
    %cst_29 = arith.constant 0.000000e+00 : f32
    %58 = vector.shape_cast %40 : vector<1x256xi1> to vector<1x256xi1>
    %59 = vector.broadcast %58 : vector<1x256xi1> to vector<4x256xi1>
    %60 = vector.broadcast %cst_29 : f32 to vector<4x256xf32>
    %61 = arith.select %59, %57, %60 : vector<4x256xi1>, vector<4x256xf32>
    %62 = vector.extract_strided_slice %41 {offsets = [0, 2], sizes = [4, 1], strides = [1, 1]} : vector<4x9xf32> to vector<4x1xf32>
    %63 = vector.broadcast %62 : vector<4x1xf32> to vector<4x256xf32>
    %64 = arith.mulf %61, %63 : vector<4x256xf32>
    %65 = arith.addf %56, %64 : vector<4x256xf32>
    %c0_30 = arith.constant 0 : index
    %c16 = arith.constant 16 : index
    %66 = vector.load %arg9[%c0_30, %c16] : memref<4x290xf32, #tpu.memory_space<vmem>>, vector<4x256xf32>
    %cst_31 = arith.constant 0.000000e+00 : f32
    %67 = vector.shape_cast %38 : vector<1x256xi1> to vector<1x256xi1>
    %68 = vector.broadcast %67 : vector<1x256xi1> to vector<4x256xi1>
    %69 = vector.broadcast %cst_31 : f32 to vector<4x256xf32>
    %70 = arith.select %68, %66, %69 : vector<4x256xi1>, vector<4x256xf32>
    %71 = vector.extract_strided_slice %41 {offsets = [0, 3], sizes = [4, 1], strides = [1, 1]} : vector<4x9xf32> to vector<4x1xf32>
    %72 = vector.broadcast %71 : vector<4x1xf32> to vector<4x256xf32>
    %73 = arith.mulf %70, %72 : vector<4x256xf32>
    %74 = arith.addf %65, %73 : vector<4x256xf32>
    %c0_32 = arith.constant 0 : index
    %c17_33 = arith.constant 17 : index
    %75 = vector.load %arg9[%c0_32, %c17_33] : memref<4x290xf32, #tpu.memory_space<vmem>>, vector<4x256xf32>
    %76 = vector.extract_strided_slice %41 {offsets = [0, 4], sizes = [4, 1], strides = [1, 1]} : vector<4x9xf32> to vector<4x1xf32>
    %77 = vector.broadcast %76 : vector<4x1xf32> to vector<4x256xf32>
    %78 = arith.mulf %75, %77 : vector<4x256xf32>
    %79 = arith.addf %74, %78 : vector<4x256xf32>
    %c0_34 = arith.constant 0 : index
    %c18 = arith.constant 18 : index
    %80 = vector.load %arg9[%c0_34, %c18] : memref<4x290xf32, #tpu.memory_space<vmem>>, vector<4x256xf32>
    %cst_35 = arith.constant 0.000000e+00 : f32
    %81 = vector.shape_cast %40 : vector<1x256xi1> to vector<1x256xi1>
    %82 = vector.broadcast %81 : vector<1x256xi1> to vector<4x256xi1>
    %83 = vector.broadcast %cst_35 : f32 to vector<4x256xf32>
    %84 = arith.select %82, %80, %83 : vector<4x256xi1>, vector<4x256xf32>
    %85 = vector.extract_strided_slice %41 {offsets = [0, 5], sizes = [4, 1], strides = [1, 1]} : vector<4x9xf32> to vector<4x1xf32>
    %86 = vector.broadcast %85 : vector<4x1xf32> to vector<4x256xf32>
    %87 = arith.mulf %84, %86 : vector<4x256xf32>
    %88 = arith.addf %79, %87 : vector<4x256xf32>
    %c0_36 = arith.constant 0 : index
    %c32 = arith.constant 32 : index
    %89 = vector.load %arg9[%c0_36, %c32] : memref<4x290xf32, #tpu.memory_space<vmem>>, vector<4x256xf32>
    %cst_37 = arith.constant 0.000000e+00 : f32
    %90 = vector.shape_cast %38 : vector<1x256xi1> to vector<1x256xi1>
    %91 = vector.broadcast %90 : vector<1x256xi1> to vector<4x256xi1>
    %92 = vector.broadcast %cst_37 : f32 to vector<4x256xf32>
    %93 = arith.select %91, %89, %92 : vector<4x256xi1>, vector<4x256xf32>
    %94 = vector.extract_strided_slice %41 {offsets = [0, 6], sizes = [4, 1], strides = [1, 1]} : vector<4x9xf32> to vector<4x1xf32>
    %95 = vector.broadcast %94 : vector<4x1xf32> to vector<4x256xf32>
    %96 = arith.mulf %93, %95 : vector<4x256xf32>
    %97 = arith.addf %88, %96 : vector<4x256xf32>
    %c0_38 = arith.constant 0 : index
    %c33 = arith.constant 33 : index
    %98 = vector.load %arg9[%c0_38, %c33] : memref<4x290xf32, #tpu.memory_space<vmem>>, vector<4x256xf32>
    %99 = vector.extract_strided_slice %41 {offsets = [0, 7], sizes = [4, 1], strides = [1, 1]} : vector<4x9xf32> to vector<4x1xf32>
    %100 = vector.broadcast %99 : vector<4x1xf32> to vector<4x256xf32>
    %101 = arith.mulf %98, %100 : vector<4x256xf32>
    %102 = arith.addf %97, %101 : vector<4x256xf32>
    %c0_39 = arith.constant 0 : index
    %c34 = arith.constant 34 : index
    %103 = vector.load %arg9[%c0_39, %c34] : memref<4x290xf32, #tpu.memory_space<vmem>>, vector<4x256xf32>
    %cst_40 = arith.constant 0.000000e+00 : f32
    %104 = vector.shape_cast %40 : vector<1x256xi1> to vector<1x256xi1>
    %105 = vector.broadcast %104 : vector<1x256xi1> to vector<4x256xi1>
    %106 = vector.broadcast %cst_40 : f32 to vector<4x256xf32>
    %107 = arith.select %105, %103, %106 : vector<4x256xi1>, vector<4x256xf32>
    %108 = vector.extract_strided_slice %41 {offsets = [0, 8], sizes = [4, 1], strides = [1, 1]} : vector<4x9xf32> to vector<4x1xf32>
    %109 = vector.broadcast %108 : vector<4x1xf32> to vector<4x256xf32>
    %110 = arith.mulf %107, %109 : vector<4x256xf32>
    %111 = arith.addf %102, %110 : vector<4x256xf32>
    %c0_41 = arith.constant 0 : index
    %c0_42 = arith.constant 0 : index
    %112 = vector.load %arg6[%c0_41, %c0_42] : memref<4x1xf32, #tpu.memory_space<vmem>>, vector<4x1xf32>
    %113 = vector.broadcast %112 : vector<4x1xf32> to vector<4x256xf32>
    %114 = arith.mulf %111, %113 : vector<4x256xf32>
    %c0_43 = arith.constant 0 : index
    %c0_44 = arith.constant 0 : index
    %115 = vector.load %arg7[%c0_43, %c0_44] : memref<4x1xf32, #tpu.memory_space<vmem>>, vector<4x1xf32>
    %116 = vector.broadcast %115 : vector<4x1xf32> to vector<4x256xf32>
    %117 = arith.addf %114, %116 : vector<4x256xf32>
    %cst_45 = arith.constant 0.000000e+00 : f32
    %118 = vector.broadcast %cst_45 : f32 to vector<4x256xf32>
    %119 = arith.maximumf %117, %118 : vector<4x256xf32>
    %c0_46 = arith.constant 0 : index
    %c4 = arith.constant 4 : index
    %c0_47 = arith.constant 0 : index
    %120 = vector.load %arg8[%c0_46, %c4, %c0_47] : memref<1x8x256xf32, #tpu.memory_space<vmem>>, vector<1x4x256xf32>
    %121 = vector.shape_cast %120 : vector<1x4x256xf32> to vector<4x256xf32>
    %122 = vector.shape_cast %119 : vector<4x256xf32> to vector<1x4x256xf32>
    tpu.vector_store %arg8[%c0_46, %c4, %c0_47], %122 {strides = array<i32>} : memref<1x8x256xf32, #tpu.memory_space<vmem>>, vector<1x4x256xf32>,
    return
  }
  func.func @transform_0(%arg0: i32) -> (i32, i32, i32) {
    %c0_i32 = arith.constant 0 : i32
    %c0_i32_0 = arith.constant 0 : i32
    %c0_i32_1 = arith.constant 0 : i32
    return %arg0, %c0_i32, %c0_i32_0 : i32, i32, i32
  }
  func.func @transform_1(%arg0: i32) -> (i32, i32) {
    %c0_i32 = arith.constant 0 : i32
    %c0_i32_0 = arith.constant 0 : i32
    %c0_i32_1 = arith.constant 0 : i32
    return %c0_i32, %c0_i32_0 : i32, i32
  }
  func.func @transform_2(%arg0: i32) -> (i32, i32) {
    %c0_i32 = arith.constant 0 : i32
    %c0_i32_0 = arith.constant 0 : i32
    %c0_i32_1 = arith.constant 0 : i32
    return %c0_i32, %c0_i32_0 : i32, i32
  }
  func.func @transform_3(%arg0: i32) -> (i32, i32) {
    %c0_i32 = arith.constant 0 : i32
    %c0_i32_0 = arith.constant 0 : i32
    %c0_i32_1 = arith.constant 0 : i32
    return %c0_i32, %c0_i32_0 : i32, i32
  }
  func.func @transform_4(%arg0: i32) -> (i32, i32) {
    %c0_i32 = arith.constant 0 : i32
    %c0_i32_0 = arith.constant 0 : i32
    %c0_i32_1 = arith.constant 0 : i32
    return %c0_i32, %c0_i32_0 : i32, i32
  }
  func.func @transform_5(%arg0: i32) -> (i32, i32) {
    %c0_i32 = arith.constant 0 : i32
    %c0_i32_0 = arith.constant 0 : i32
    %c0_i32_1 = arith.constant 0 : i32
    return %c0_i32, %c0_i32_0 : i32, i32
  }
  func.func @transform_6(%arg0: i32) -> (i32, i32) {
    %c0_i32 = arith.constant 0 : i32
    %c0_i32_0 = arith.constant 0 : i32
    %c0_i32_1 = arith.constant 0 : i32
    return %c0_i32, %c0_i32_0 : i32, i32
  }
  func.func @transform_7(%arg0: i32) -> (i32, i32, i32) {
    %c0_i32 = arith.constant 0 : i32
    %c0_i32_0 = arith.constant 0 : i32
    %c0_i32_1 = arith.constant 0 : i32
    return %arg0, %c0_i32, %c0_i32_0 : i32, i32, i32
  }
}

</mosaic_0001>

<llo_original>
// kernel: tpu_custom_call.1
$region0: #{tpu_custom_call.1}
  #allocation0 [shape = 'u32[]', space=smem, size = 0x4, offset = 0x4, fixed_abs, tag = 'smem constant byte address 0x4 - core index']
  #allocation1 [shape = 'u32[144,128]{1,0:T(1,128)}', space=vmem, size = 0x12000, scoped, tag = 'internal scratch']
  #allocation2 [shape = 'f32[4,290]{1,0:T(4,128)}', space=vmem, size = 0x1800, scoped, tag = 'scratch operand']
  %s0 = inlined_call_operand.vmem [shape: f32[2,4,256], index: 0, kind: input, shape index: {}]
  %s1 = inlined_call_operand.vmem [shape: bf16[4,4], index: 1, kind: input, shape index: {}]
  %s2 = inlined_call_operand.vmem [shape: f32[4,1], index: 2, kind: input, shape index: {}]
  %s3 = inlined_call_operand.vmem [shape: f32[4,1], index: 3, kind: input, shape index: {}]
  %s4 = inlined_call_operand.vmem [shape: f32[4,9], index: 4, kind: input, shape index: {}]
  %s5 = inlined_call_operand.vmem [shape: f32[4,1], index: 5, kind: input, shape index: {}]
  %s6 = inlined_call_operand.vmem [shape: f32[4,1], index: 6, kind: input, shape index: {}]
  %s7 = inlined_call_operand.hbm [shape: f32[2,8,256], index: 7, kind: output, shape index: {}]
  %s8 = sld [smem:[#allocation0]]
  $region61: #{tpu_custom_call.1} parent=0
    _
  %s10 = ssub.s32 1, %s8
  %s11 = scalar_select 0, %s10, %s8
  $region1: #{tpu_custom_call.1} parent=0
    #allocation3 [shape = 'u8[16384]{0}', space=vmem, size = 0x4000, scoped, tag = 'output window, operand 0']
    #allocation4 [shape = 's32[2]{0}', space=sflag, size = 0x8, scoped, tag = 'scoped memory for tpu_custom_call.1']
    %12 = vsyncpa [#allocation4], 0
    %s13 = scalar_lea.sflag [#allocation4], 1
    %14 = vsyncpa %s13, 0
    loop: start=0, step=1, limit=4
    $region2: #{tpu_custom_call.1} parent=1 // loop_pre_header
      _
    $region3: #{tpu_custom_call.1} parent=1 // loop_header
      %s16 = sphi 0, %s20
      %p17 = scmp.ge.s32.totalorder %s16, 4
      %s26 = sphi 0, %s28
      %s29 = sphi 0, %s26
      %s30 = sphi 0, %s29
      %s46 = sphi 0, %s30
      %s50 = sphi 0, %s50
      %s52 = sphi 0, %s50
      %s53 = sphi 0, %s52
      %s67 = sphi 0, %s53
      %s71 = sphi 0, %s71
      %s73 = sphi 0, %s71
      %s74 = sphi 0, %s73
      %s88 = sphi 0, %s74
      %s92 = sphi 0, %s92
      %s94 = sphi 0, %s92
      %s95 = sphi 0, %s94
      %s109 = sphi 0, %s95
      %s113 = sphi 0, %s113
      %s115 = sphi 0, %s113
      %s116 = sphi 0, %s115
      %s130 = sphi 0, %s116
      %s134 = sphi 0, %s134
      %s136 = sphi 0, %s134
      %s137 = sphi 0, %s136
      %s151 = sphi 0, %s137
      %s155 = sphi 0, %s155
      %s157 = sphi 0, %s155
      %s158 = sphi 0, %s157
      %s172 = sphi 0, %s158
      %s178 = sphi 0, %s180
      %s181 = sphi 0, %s178
      %s182 = sphi 0, %s181
      %s198 = sphi 0, %s182
    $region4: #{tpu_custom_call.1} parent=1 // loop_header_branch
      %19 = sbr.rel (%p17) target = $region8
    $region5: #{tpu_custom_call.1} parent=1 // loop_body
      %s21 = ssub.s32 %s16, 1
      %s22 = ssub.s32 %s16, 2
      %s23 = sadd.s32 %s16, 1
      %s24 = ssub.s32 %s16, %s23
      %p25 = scmp.eq.s32.totalorder %s24, 0
      %s27 = sadd.s32 %s26, 1
      %s28 = scalar_select %p25, %s26, %s27
      %p31 = pneg %p25
      %p32 = scmp.eq.s32.totalorder %s16, 1
      %p33 = por %p31, %p32
      %p34 = scmp.ne.s32.totalorder %s26, %s29
      %p35 = scmp.eq.s32.totalorder %s16, 0
      %p36 = por %p34, %p35
      %p37 = scmp.ne.s32.totalorder %s26, %s29
      %p38 = scmp.eq.s32.totalorder %s21, 1
      %p39 = por %p37, %p38
      %p40 = scmp.ne.s32.totalorder %s29, %s30
      %p41 = scmp.eq.s32.totalorder %s21, 0
      %p42 = por %p40, %p41
      %p43 = scmp.ne.s32.totalorder %s29, %s30
      %p44 = scmp.eq.s32.totalorder %s22, 1
      %p45 = por %p43, %p44
      %p47 = scmp.ne.s32.totalorder %s30, %s46
      %p48 = scmp.eq.s32.totalorder %s22, 0
      %p49 = por %p47, %p48
      %s51 = sadd.s32 %s50, 1
      %p54 = scmp.eq.s32.totalorder %s16, 1
      %p55 = scmp.ne.s32.totalorder %s50, %s52
      %p56 = scmp.eq.s32.totalorder %s16, 0
      %p57 = por %p55, %p56
      %p58 = scmp.ne.s32.totalorder %s50, %s52
      %p59 = scmp.eq.s32.totalorder %s21, 1
      %p60 = por %p58, %p59
      %p61 = scmp.ne.s32.totalorder %s52, %s53
      %p62 = scmp.eq.s32.totalorder %s21, 0
      %p63 = por %p61, %p62
      %p64 = scmp.ne.s32.totalorder %s52, %s53
      %p65 = scmp.eq.s32.totalorder %s22, 1
      %p66 = por %p64, %p65
      %p68 = scmp.ne.s32.totalorder %s53, %s67
      %p69 = scmp.eq.s32.totalorder %s22, 0
      %p70 = por %p68, %p69
      %s72 = sadd.s32 %s71, 1
      %p75 = scmp.eq.s32.totalorder %s16, 1
      %p76 = scmp.ne.s32.totalorder %s71, %s73
      %p77 = scmp.eq.s32.totalorder %s16, 0
      %p78 = por %p76, %p77
      %p79 = scmp.ne.s32.totalorder %s71, %s73
      %p80 = scmp.eq.s32.totalorder %s21, 1
      %p81 = por %p79, %p80
      %p82 = scmp.ne.s32.totalorder %s73, %s74
      %p83 = scmp.eq.s32.totalorder %s21, 0
      %p84 = por %p82, %p83
      %p85 = scmp.ne.s32.totalorder %s73, %s74
      %p86 = scmp.eq.s32.totalorder %s22, 1
      %p87 = por %p85, %p86
      %p89 = scmp.ne.s32.totalorder %s74, %s88
      %p90 = scmp.eq.s32.totalorder %s22, 0
      %p91 = por %p89, %p90
      %s93 = sadd.s32 %s92, 1
      %p96 = scmp.eq.s32.totalorder %s16, 1
      %p97 = scmp.ne.s32.totalorder %s92, %s94
      %p98 = scmp.eq.s32.totalorder %s16, 0
      %p99 = por %p97, %p98
      %p100 = scmp.ne.s32.totalorder %s92, %s94
      %p101 = scmp.eq.s32.totalorder %s21, 1
      %p102 = por %p100, %p101
      %p103 = scmp.ne.s32.totalorder %s94, %s95
      %p104 = scmp.eq.s32.totalorder %s21, 0
      %p105 = por %p103, %p104
      %p106 = scmp.ne.s32.totalorder %s94, %s95
      %p107 = scmp.eq.s32.totalorder %s22, 1
      %p108 = por %p106, %p107
      %p110 = scmp.ne.s32.totalorder %s95, %s109
      %p111 = scmp.eq.s32.totalorder %s22, 0
      %p112 = por %p110, %p111
      %s114 = sadd.s32 %s113, 1
      %p117 = scmp.eq.s32.totalorder %s16, 1
      %p118 = scmp.ne.s32.totalorder %s113, %s115
      %p119 = scmp.eq.s32.totalorder %s16, 0
      %p120 = por %p118, %p119
      %p121 = scmp.ne.s32.totalorder %s113, %s115
      %p122 = scmp.eq.s32.totalorder %s21, 1
      %p123 = por %p121, %p122
      %p124 = scmp.ne.s32.totalorder %s115, %s116
      %p125 = scmp.eq.s32.totalorder %s21, 0
      %p126 = por %p124, %p125
      %p127 = scmp.ne.s32.totalorder %s115, %s116
      %p128 = scmp.eq.s32.totalorder %s22, 1
      %p129 = por %p127, %p128
      %p131 = scmp.ne.s32.totalorder %s116, %s130
      %p132 = scmp.eq.s32.totalorder %s22, 0
      %p133 = por %p131, %p132
      %s135 = sadd.s32 %s134, 1
      %p138 = scmp.eq.s32.totalorder %s16, 1
      %p139 = scmp.ne.s32.totalorder %s134, %s136
      %p140 = scmp.eq.s32.totalorder %s16, 0
      %p141 = por %p139, %p140
      %p142 = scmp.ne.s32.totalorder %s134, %s136
      %p143 = scmp.eq.s32.totalorder %s21, 1
      %p144 = por %p142, %p143
      %p145 = scmp.ne.s32.totalorder %s136, %s137
      %p146 = scmp.eq.s32.totalorder %s21, 0
      %p147 = por %p145, %p146
      %p148 = scmp.ne.s32.totalorder %s136, %s137
      %p149 = scmp.eq.s32.totalorder %s22, 1
      %p150 = por %p148, %p149
      %p152 = scmp.ne.s32.totalorder %s137, %s151
      %p153 = scmp.eq.s32.totalorder %s22, 0
      %p154 = por %p152, %p153
      %s156 = sadd.s32 %s155, 1
      %p159 = scmp.eq.s32.totalorder %s16, 1
      %p160 = scmp.ne.s32.totalorder %s155, %s157
      %p161 = scmp.eq.s32.totalorder %s16, 0
      %p162 = por %p160, %p161
      %p163 = scmp.ne.s32.totalorder %s155, %s157
      %p164 = scmp.eq.s32.totalorder %s21, 1
      %p165 = por %p163, %p164
      %p166 = scmp.ne.s32.totalorder %s157, %s158
      %p167 = scmp.eq.s32.totalorder %s21, 0
      %p168 = por %p166, %p167
      %p169 = scmp.ne.s32.totalorder %s157, %s158
      %p170 = scmp.eq.s32.totalorder %s22, 1
      %p171 = por %p169, %p170
      %p173 = scmp.ne.s32.totalorder %s158, %s172
      %p174 = scmp.eq.s32.totalorder %s22, 0
      %p175 = por %p173, %p174
      %s176 = ssub.s32 %s16, %s23
      %p177 = scmp.eq.s32.totalorder %s176, 0
      %s179 = sadd.s32 %s178, 1
      %s180 = scalar_select %p177, %s178, %s179
      %p183 = pneg %p177
      %p184 = scmp.eq.s32.totalorder %s16, 1
      %p185 = por %p183, %p184
      %p186 = scmp.ne.s32.totalorder %s178, %s181
      %p187 = scmp.eq.s32.totalorder %s16, 0
      %p188 = por %p186, %p187
      %p189 = scmp.ne.s32.totalorder %s178, %s181
      %p190 = scmp.eq.s32.totalorder %s21, 1
      %p191 = por %p189, %p190
      %p192 = scmp.ne.s32.totalorder %s181, %s182
      %p193 = scmp.eq.s32.totalorder %s21, 0
      %p194 = por %p192, %p193
      %p195 = scmp.ne.s32.totalorder %s181, %s182
      %p196 = scmp.eq.s32.totalorder %s22, 1
      %p197 = por %p195, %p196
      %p199 = scmp.ne.s32.totalorder %s182, %s198
      %p200 = scmp.eq.s32.totalorder %s22, 0
      %p201 = por %p199, %p200
      %p202 = scmp.le.s32.totalorder 1, %s16
      %p203 = scmp.lt.s32.totalorder %s16, 3
      %p204 = pnand %p202, %p203
      %p205 = pneg %p204
      // Predicated region
      $region9: #{tpu_custom_call.1} parent=5 // pred_check
        _
      $region10: #{tpu_custom_call.1} parent=5 // pred_check_branch
        %207 = sbr.rel (%p204) target = $region12
      $region11: #{tpu_custom_call.1} parent=5 // pred_region
        %s208 = ssub.s32 %s16, 1
        // Predicated region
        $region13: #{tpu_custom_call.1} parent=11 // pred_check
          %p209 = pneg %p63
        $region14: #{tpu_custom_call.1} parent=11 // pred_check_branch
          %211 = sbr.rel (%p209) target = $region16
        $region15: #{tpu_custom_call.1} parent=11 // pred_region
          _
        $region16: #{tpu_custom_call.1} parent=11 // pred_fallthru
          _
        // Predicated region
        $region17: #{tpu_custom_call.1} parent=11 // pred_check
          %p212 = pneg %p84
        $region18: #{tpu_custom_call.1} parent=11 // pred_check_branch
          %214 = sbr.rel (%p212) target = $region20
        $region19: #{tpu_custom_call.1} parent=11 // pred_region
          _
        $region20: #{tpu_custom_call.1} parent=11 // pred_fallthru
          _
        // Predicated region
        $region21: #{tpu_custom_call.1} parent=11 // pred_check
          %p215 = pneg %p105
        $region22: #{tpu_custom_call.1} parent=11 // pred_check_branch
          %217 = sbr.rel (%p215) target = $region24
        $region23: #{tpu_custom_call.1} parent=11 // pred_region
          _
        $region24: #{tpu_custom_call.1} parent=11 // pred_fallthru
          _
        // Predicated region
        $region25: #{tpu_custom_call.1} parent=11 // pred_check
          %p218 = pneg %p126
        $region26: #{tpu_custom_call.1} parent=11 // pred_check_branch
          %220 = sbr.rel (%p218) target = $region28
        $region27: #{tpu_custom_call.1} parent=11 // pred_region
          _
        $region28: #{tpu_custom_call.1} parent=11 // pred_fallthru
          _
        // Predicated region
        $region29: #{tpu_custom_call.1} parent=11 // pred_check
          %p221 = pneg %p147
        $region30: #{tpu_custom_call.1} parent=11 // pred_check_branch
          %223 = sbr.rel (%p221) target = $region32
        $region31: #{tpu_custom_call.1} parent=11 // pred_region
          _
        $region32: #{tpu_custom_call.1} parent=11 // pred_fallthru
          _
        // Predicated region
        $region33: #{tpu_custom_call.1} parent=11 // pred_check
          %p224 = pneg %p168
        $region34: #{tpu_custom_call.1} parent=11 // pred_check_branch
          %226 = sbr.rel (%p224) target = $region36
        $region35: #{tpu_custom_call.1} parent=11 // pred_region
          _
        $region36: #{tpu_custom_call.1} parent=11 // pred_fallthru
          _
      $region12: #{tpu_custom_call.1} parent=5 // pred_fallthru
        _
      %p227 = scmp.lt.s32.totalorder %s16, 2
      // Predicated region
      $region37: #{tpu_custom_call.1} parent=5 // pred_check
        %p228 = pneg %p227
      $region38: #{tpu_custom_call.1} parent=5 // pred_check_branch
        %230 = sbr.rel (%p228) target = $region40
      $region39: #{tpu_custom_call.1} parent=5 // pred_region
        // Predicated region
        $region41: #{tpu_custom_call.1} parent=39 // pred_check
          %p231 = pneg %p36
        $region42: #{tpu_custom_call.1} parent=39 // pred_check_branch
          %233 = sbr.rel (%p231) target = $region44
        $region43: #{tpu_custom_call.1} parent=39 // pred_region
          %p234 = scmp.lt.s32.totalorder %s16, 1
          %s235 = scalar_select %p234, %s16, 1
          %s236 = smul.addr %s235, 2
          %s237 = smul.addr %s236, 4
          %s238 = scalar_lea.vmem %s0, %s237
        $region44: #{tpu_custom_call.1} parent=39 // pred_fallthru
          _
      $region40: #{tpu_custom_call.1} parent=5 // pred_fallthru
        _
      %p239 = scmp.le.s32.totalorder 1, %s16
      %p240 = scmp.lt.s32.totalorder %s16, 3
      %p241 = pnand %p239, %p240
      %p242 = pneg %p241
      // Predicated region
      $region45: #{tpu_custom_call.1} parent=5 // pred_check
        _
      $region46: #{tpu_custom_call.1} parent=5 // pred_check_branch
        %244 = sbr.rel (%p241) target = $region48
      $region47: #{tpu_custom_call.1} parent=5 // pred_region
        %s245 = ssub.s32 %s16, 1
        %p246 = scmp.lt.s32.totalorder %s21, 1
        %s247 = scalar_select %p246, %s21, 1
        %s248 = smul.addr %s247, 2
        %s249 = smul.addr %s248, 4
        %s250 = scalar_lea.vmem %s0, %s249
        %p251 = pneg %p42
        %p252 = pneg %p39
        %p253 = pneg %p63
        %p254 = pneg %p60
        %p255 = pneg %p84
        %p256 = pneg %p81
        %p257 = pneg %p105
        %p258 = pneg %p102
        %p259 = pneg %p126
        %p260 = pneg %p123
        %p261 = pneg %p147
        %p262 = pneg %p144
        %p263 = pneg %p168
        %p264 = pneg %p165
        %p265 = pneg %p194
        %p266 = pneg %p191
        %s267 = sand.u32 %s181, 1
        %s268 = scalar_lea.sflag [#allocation4], %s267
        %s269 = sand.u32 %s181, 1
        %s270 = smul.addr %s269, 16
        %s271 = scalar_lea.vmem [#allocation3], %s270
        %p272 = scmp.lt.s32.totalorder %s21, 1
        %s273 = scalar_select %p272, %s21, 1
        %s274 = smul.addr %s273, 2
        %s275 = smul.addr %s274, 4
        %s276 = scalar_lea.vmem %s0, %s275
        %v278 = vld [vmem:[%s276] sm:$0xff]
        %v280 = vcombine.high %v278, %v278
        %v282 = vpack.c.bf16 %v278, %v278
        %v283 = vpack.c.bf16 %v280, %v280
        %v284 = vld [vmem:[%s1] sm:$0x3]
        %vm285 = vcmask 31744
        %v287 = vsel %vm285, %v284, 0
        %vm289 = vcmask 1041408
        %v291 = vsel %vm289, %v282, 0
        %v294 = vsel %vm289, %v283, 0
        %296 = vmatprep.subr.bf16.mxu0 %v294
        %297 = vmatpush1.bf16.msra.mxu0 %v291
        %298 = vmatprep.subr.bf16.mxu0 0
        %299 = vmatpush1.bf16.msra.mxu0 0
        %300 = vmatprep.subr.bf16.mxu0 0
        %301 = vmatpush1.bf16.msra.mxu0 0
        %302 = vmatprep.subr.bf16.mxu0 0
        %303 = vmatpush1.bf16.msra.mxu0 0
        %304 = vmatprep.subr.bf16.mxu0 0
        %305 = vmatpush1.bf16.msra.mxu0 0
        %306 = vmatprep.subr.bf16.mxu0 0
        %307 = vmatpush1.bf16.msra.mxu0 0
        %308 = vmatprep.subr.bf16.mxu0 0
        %309 = vmatpush1.bf16.msra.mxu0 0
        %310 = vmatprep.subr.bf16.mxu0 0
        %311 = vmatpush1.bf16.msra.mxu0 0
        %312 = vmatprep.subr.bf16.mxu0 0
        %313 = vmatpush1.bf16.msra.mxu0 0
        %314 = vmatprep.subr.bf16.mxu0 0
        %315 = vmatpush1.bf16.msra.mxu0 0
        %316 = vmatprep.subr.bf16.mxu0 0
        %317 = vmatpush1.bf16.msra.mxu0 0
        %318 = vmatprep.subr.bf16.mxu0 0
        %319 = vmatpush1.bf16.msra.mxu0 0
        %320 = vmatprep.subr.bf16.mxu0 0
        %321 = vmatpush1.bf16.msra.mxu0 0
        %322 = vmatprep.subr.bf16.mxu0 0
        %323 = vmatpush1.bf16.msra.mxu0 0
        %324 = vmatprep.subr.bf16.mxu0 0
        %325 = vmatpush1.bf16.msra.mxu0 0
        %326 = vmatprep.subr.bf16.mxu0 0
        %327 = vmatpush1.bf16.msra.mxu0 0
        %328 = vmatprep.mubr.bf16.mxu0 0
        %329 = vmatmul.mubr.bf16.gmra.mrb[0].mxu0 %v287
        %v330 = vpop.f32.mrb[0].mxu0
        %v331 = vadd.f32 0.0, %v330
        %v332 = vpop.f32.mrb[0].mxu0
        %v333 = vadd.f32 0.0, %v332
        %v334 = vpop.f32.mrb[0].mxu0
        %v335 = vpop.f32.mrb[0].mxu0
        %336 = vdwg.mxu0
        %v337 = vld [vmem:[%s2] sm:$0xf]
        %339 = vset.pattern.permute.xlu0 0
        %340 = vperm.xlu0 %339, %v337
        %v341 = vpop.permute.xlu0 %340
        %v343 = vmul.f32 %v331, %v341
        %v344 = vmul.f32 %v333, %v341
        %v345 = vld [vmem:[%s3] sm:$0xf]
        %347 = vset.pattern.permute.xlu0 0
        %348 = vperm.xlu0 %347, %v345
        %v349 = vpop.permute.xlu0 %348
        %v351 = vadd.f32 %v343, %v349
        %v352 = vadd.f32 %v344, %v349
        %v353 = vmax.f32 %v351, 0.0
        %v354 = vmax.f32 %v352, 0.0
        %355 = vst [vmem:[%s271] sm:$0xf] %v353
        %356 = vst [vmem:[%s271 + $0x8] sm:$0xf] %v354
        %vm357 = vcmask 134144
        %358 = vst.msk [vmem:[#allocation2] sm:$0xf] %vm357, 0.0
        %vm359 = vcmask 273544
        %360 = vst.msk [vmem:[#allocation2 + $0x8] sm:$0xf] %vm359, 0.0
        %v363 = vcombine.low %v353, %v354
        %364 = vrot.lane.b32.xlu0 %v363, 17
        %v365 = vpop.permute.xlu0 %364
        %v366 = vrot.slane %v365, 4
        %vm367 = vcmask 138240
        %v368 = vsel %vm367, %v366, %v365
        %vm371 = vcmask 1043592
        %vm372 = vcmask 1047556
        %vm373 = vmor %vm372, %vm371
        %374 = vst.msk [vmem:[#allocation2] sm:$0xff] %vm373, %v368
        %375 = vst.msk [vmem:[#allocation2 + $0x8] sm:$0xf] %vm357, %v366
        %v376 = vlaneseq
        %v377 = vand.u32 %v376, 127
        %v378 = vadd.s32 %v377, 128
        %vm379 = vcmp.lt.s32.totalorder %v377, 0
        %v380 = vsub.s32 0, %v377
        %v381 = vsel %vm379, %v380, %v377
        %v382 = vshrl.u32 %v381, 4
        %v383 = vand.u32 %v381, 15
        %v384 = vsub.s32 0, %v383
        %v385 = vsel %vm379, %v384, %v383
        %vm386 = vcmp.lt.s32.totalorder %v378, 0
        %v387 = vsub.s32 0, %v378
        %v388 = vsel %vm386, %v387, %v378
        %v389 = vshrl.u32 %v388, 4
        %v390 = vand.u32 %v388, 15
        %v391 = vsub.s32 0, %v390
        %v392 = vsel %vm386, %v391, %v390
        %vm393 = vcmp.ne.s32.totalorder %v385, 0
        %vm394 = vcmp.ne.s32.totalorder %v392, 0
        %vm395 = vcmp.lt.s32.totalorder %v385, 0
        %vm396 = vcmp.lt.s32.totalorder %v392, 0
        %vm397 = vmand %vm395, %vm393
        %vm398 = vmand %vm396, %vm394
        %v399 = vadd.s32 %v385, 16
        %v400 = vadd.s32 %v392, 16
        %v401 = vsel %vm397, %v399, %v385
        %v402 = vsel %vm398, %v400, %v392
        %vm403 = vcmp.ge.s32.totalorder %v401, 1
        %vm404 = vcmp.ge.s32.totalorder %v402, 1
        %vm405 = vcmp.le.s32.totalorder %v401, 14
        %vm406 = vcmp.le.s32.totalorder %v402, 14
        %v407 = vld [vmem:[%s4] sm:$0xf]
        %v408 = vld [vmem:[#allocation2] sm:$0xff]
        %v409 = vsel %vm403, 1, 0
        %v410 = vsel %vm404, 1, 0
        %vm411 = vcmp.eq.s32.totalorder %v409, 1
        %vm412 = vcmp.eq.s32.totalorder %v410, 1
        %v414 = vcombine.high %v408, %v408
        %v416 = vsel %vm411, %v408, 0.0
        %v417 = vsel %vm412, %v414, 0.0
        %419 = vset.pattern.permute.xlu0 0
        %420 = vperm.xlu0 %419, %v407
        %v421 = vpop.permute.xlu0 %420
        %v423 = vmul.f32 %v416, %v421
        %v424 = vmul.f32 %v417, %v421
        %v425 = vadd.f32 %v423, 0.0
        %v426 = vadd.f32 %v424, 0.0
        %v427 = vld [vmem:[#allocation2] sm:$0xff]
        %v428 = vld [vmem:[#allocation2 + $0x8] sm:$0xf]
        %429 = vset.pattern.permute.xlu0 1
        %430 = vperm.xlu0 %429, %v407
        %v431 = vpop.permute.xlu0 %430
        %v433 = vunpack.c.l.s4 839922192
        %v434 = vunpack.c.0.s8 %v433
        %v435 = vlaneseq
        %v436 = vshrl.u32 %v435, 7
        %v437 = vsub.s32 %v434, %v436
        %v438 = vrot.slane %v431, %v437
        %v440 = vmul.f32 %v427, %v438
        %v441 = vmul.f32 %v428, %v438
        %v444 = vcombine.high %v440, %v440
        %445 = vrot.lane.b32.xlu0 %v440, 127
        %v446 = vpop.permute.xlu0 %445
        %447 = vrot.lane.b32.xlu0 %v444, 127
        %v448 = vpop.permute.xlu0 %447
        %449 = vrot.lane.b32.xlu0 %v441, 127
        %v450 = vpop.permute.xlu0 %449
        %vm451 = vcmask 1039360
        %v452 = vsel %vm451, %v446, %v448
        %v453 = vsel %vm451, %v448, %v450
        %v456 = vadd.f32 %v425, %v452
        %v457 = vadd.f32 %v426, %v453
        %v458 = vld [vmem:[#allocation2] sm:$0xff]
        %v459 = vld [vmem:[#allocation2 + $0x8] sm:$0xf]
        %v460 = vsel %vm405, 1, 0
        %v461 = vsel %vm406, 1, 0
        %vm462 = vcmp.eq.s32.totalorder %v460, 1
        %vm463 = vcmp.eq.s32.totalorder %v461, 1
        %v466 = vcombine.high %v458, %v458
        %467 = vrot.lane.b32.xlu0 %v458, 126
        %v468 = vpop.permute.xlu0 %467
        %469 = vrot.lane.b32.xlu0 %v466, 126
        %v470 = vpop.permute.xlu0 %469
        %471 = vrot.lane.b32.xlu0 %v459, 126
        %v472 = vpop.permute.xlu0 %471
        %vm473 = vcmask 1031168
        %v474 = vsel %vm473, %v468, %v470
        %v475 = vsel %vm473, %v470, %v472
        %v478 = vsel %vm462, %v474, 0.0
        %v479 = vsel %vm463, %v475, 0.0
        %480 = vset.pattern.permute.xlu0 2
        %481 = vperm.xlu0 %480, %v407
        %v482 = vpop.permute.xlu0 %481
        %v484 = vmul.f32 %v478, %v482
        %v485 = vmul.f32 %v479, %v482
        %v486 = vadd.f32 %v456, %v484
        %v487 = vadd.f32 %v457, %v485
        %v488 = vld [vmem:[#allocation2] sm:$0xff]
        %v489 = vld [vmem:[#allocation2 + $0x8] sm:$0xf]
        %v492 = vcombine.high %v488, %v488
        %493 = vrot.lane.b32.xlu0 %v488, 112
        %v494 = vpop.permute.xlu0 %493
        %495 = vrot.lane.b32.xlu0 %v492, 112
        %v496 = vpop.permute.xlu0 %495
        %497 = vrot.lane.b32.xlu0 %v489, 112
        %v498 = vpop.permute.xlu0 %497
        %vm499 = vcmask 916480
        %v500 = vsel %vm499, %v494, %v496
        %v501 = vsel %vm499, %v496, %v498
        %v504 = vsel %vm411, %v500, 0.0
        %v505 = vsel %vm412, %v501, 0.0
        %506 = vset.pattern.permute.xlu0 3
        %507 = vperm.xlu0 %506, %v407
        %v508 = vpop.permute.xlu0 %507
        %v510 = vmul.f32 %v504, %v508
        %v511 = vmul.f32 %v505, %v508
        %v512 = vadd.f32 %v486, %v510
        %v513 = vadd.f32 %v487, %v511
        %v514 = vld [vmem:[#allocation2] sm:$0xff]
        %v515 = vld [vmem:[#allocation2 + $0x8] sm:$0xf]
        %516 = vset.pattern.permute.xlu0 4
        %517 = vperm.xlu0 %516, %v407
        %v518 = vpop.permute.xlu0 %517
        %v520 = vunpack.c.l.s4 839922192
        %v521 = vunpack.c.0.s8 %v520
        %v522 = vlaneseq
        %v523 = vshrl.u32 %v522, 7
        %v524 = vsub.s32 %v521, %v523
        %v525 = vrot.slane %v518, %v524
        %v527 = vmul.f32 %v514, %v525
        %v528 = vmul.f32 %v515, %v525
        %v531 = vcombine.high %v527, %v527
        %532 = vrot.lane.b32.xlu0 %v527, 111
        %v533 = vpop.permute.xlu0 %532
        %534 = vrot.lane.b32.xlu0 %v531, 111
        %v535 = vpop.permute.xlu0 %534
        %536 = vrot.lane.b32.xlu0 %v528, 111
        %v537 = vpop.permute.xlu0 %536
        %vm538 = vcmask 908288
        %v539 = vsel %vm538, %v533, %v535
        %v540 = vsel %vm538, %v535, %v537
        %v543 = vadd.f32 %v512, %v539
        %v544 = vadd.f32 %v513, %v540
        %v545 = vld [vmem:[#allocation2] sm:$0xff]
        %v546 = vld [vmem:[#allocation2 + $0x8] sm:$0xf]
        %v549 = vcombine.high %v545, %v545
        %550 = vrot.lane.b32.xlu0 %v545, 110
        %v551 = vpop.permute.xlu0 %550
        %552 = vrot.lane.b32.xlu0 %v549, 110
        %v553 = vpop.permute.xlu0 %552
        %554 = vrot.lane.b32.xlu0 %v546, 110
        %v555 = vpop.permute.xlu0 %554
        %vm556 = vcmask 900096
        %v557 = vsel %vm556, %v551, %v553
        %v558 = vsel %vm556, %v553, %v555
        %v561 = vsel %vm462, %v557, 0.0
        %v562 = vsel %vm463, %v558, 0.0
        %563 = vset.pattern.permute.xlu0 5
        %564 = vperm.xlu0 %563, %v407
        %v565 = vpop.permute.xlu0 %564
        %v567 = vmul.f32 %v561, %v565
        %v568 = vmul.f32 %v562, %v565
        %v569 = vadd.f32 %v543, %v567
        %v570 = vadd.f32 %v544, %v568
        %v571 = vld [vmem:[#allocation2] sm:$0xff]
        %v572 = vld [vmem:[#allocation2 + $0x8] sm:$0xf]
        %v575 = vcombine.high %v571, %v571
        %576 = vrot.lane.b32.xlu0 %v571, 96
        %v577 = vpop.permute.xlu0 %576
        %578 = vrot.lane.b32.xlu0 %v575, 96
        %v579 = vpop.permute.xlu0 %578
        %580 = vrot.lane.b32.xlu0 %v572, 96
        %v581 = vpop.permute.xlu0 %580
        %vm582 = vcmask 785408
        %v583 = vsel %vm582, %v577, %v579
        %v584 = vsel %vm582, %v579, %v581
        %v587 = vsel %vm411, %v583, 0.0
        %v588 = vsel %vm412, %v584, 0.0
        %589 = vset.pattern.permute.xlu0 6
        %590 = vperm.xlu0 %589, %v407
        %v591 = vpop.permute.xlu0 %590
        %v593 = vmul.f32 %v587, %v591
        %v594 = vmul.f32 %v588, %v591
        %v595 = vadd.f32 %v569, %v593
        %v596 = vadd.f32 %v570, %v594
        %v597 = vld [vmem:[#allocation2] sm:$0xff]
        %v598 = vld [vmem:[#allocation2 + $0x8] sm:$0xf]
        %599 = vset.pattern.permute.xlu0 7
        %600 = vperm.xlu0 %599, %v407
        %v601 = vpop.permute.xlu0 %600
        %v603 = vunpack.c.l.s4 839922192
        %v604 = vunpack.c.0.s8 %v603
        %v605 = vlaneseq
        %v606 = vshrl.u32 %v605, 7
        %v607 = vsub.s32 %v604, %v606
        %v608 = vrot.slane %v601, %v607
        %v610 = vmul.f32 %v597, %v608
        %v611 = vmul.f32 %v598, %v608
        %v614 = vcombine.high %v610, %v610
        %615 = vrot.lane.b32.xlu0 %v610, 95
        %v616 = vpop.permute.xlu0 %615
        %617 = vrot.lane.b32.xlu0 %v614, 95
        %v618 = vpop.permute.xlu0 %617
        %619 = vrot.lane.b32.xlu0 %v611, 95
        %v620 = vpop.permute.xlu0 %619
        %vm621 = vcmask 777216
        %v622 = vsel %vm621, %v616, %v618
        %v623 = vsel %vm621, %v618, %v620
        %v626 = vadd.f32 %v595, %v622
        %v627 = vadd.f32 %v596, %v623
        %v628 = vld [vmem:[#allocation2] sm:$0xff]
        %v629 = vld [vmem:[#allocation2 + $0x8] sm:$0xf]
        %v632 = vcombine.high %v628, %v628
        %633 = vrot.lane.b32.xlu0 %v628, 94
        %v634 = vpop.permute.xlu0 %633
        %635 = vrot.lane.b32.xlu0 %v632, 94
        %v636 = vpop.permute.xlu0 %635
        %637 = vrot.lane.b32.xlu0 %v629, 94
        %v638 = vpop.permute.xlu0 %637
        %vm639 = vcmask 769024
        %v640 = vsel %vm639, %v634, %v636
        %v641 = vsel %vm639, %v636, %v638
        %v644 = vsel %vm462, %v640, 0.0
        %v645 = vsel %vm463, %v641, 0.0
        %646 = vset.pattern.permute.xlu0 8
        %647 = vperm.xlu0 %646, %v407
        %v648 = vpop.permute.xlu0 %647
        %v650 = vmul.f32 %v644, %v648
        %v651 = vmul.f32 %v645, %v648
        %v652 = vadd.f32 %v626, %v650
        %v653 = vadd.f32 %v627, %v651
        %v654 = vld [vmem:[%s5] sm:$0xf]
        %656 = vset.pattern.permute.xlu0 0
        %657 = vperm.xlu0 %656, %v654
        %v658 = vpop.permute.xlu0 %657
        %v660 = vmul.f32 %v652, %v658
        %v661 = vmul.f32 %v653, %v658
        %v662 = vld [vmem:[%s6] sm:$0xf]
        %664 = vset.pattern.permute.xlu0 0
        %665 = vperm.xlu0 %664, %v662
        %v666 = vpop.permute.xlu0 %665
        %v668 = vadd.f32 %v660, %v666
        %v669 = vadd.f32 %v661, %v666
        %v670 = vmax.f32 %v668, 0.0
        %v671 = vmax.f32 %v669, 0.0
        %v674 = vrot.slane %v670, 4
        %v675 = vrot.slane %v671, 4
        %678 = vst [vmem:[%s271] sm:$0xf0] %v674
        %679 = vst [vmem:[%s271 + $0x8] sm:$0xf0] %v675
        %s680 = sand.u32 %s181, 1
        %s681 = scalar_lea.sflag [#allocation4], %s680
        %s682 = sand.u32 %s181, 1
        %s683 = smul.addr %s682, 16
        %s684 = scalar_lea.vmem [#allocation3], %s683
        // Predicated region
        $region49: #{tpu_custom_call.1} parent=47 // pred_check
          %p685 = pneg %p191
        $region50: #{tpu_custom_call.1} parent=47 // pred_check_branch
          %687 = sbr.rel (%p685) target = $region52
        $region51: #{tpu_custom_call.1} parent=47 // pred_region
          %s689 = ssub.s32 256, 256
          %690 = vsyncadd %s681, %s689
          %s691 = smul.addr %s21, 2
          %s692 = smul.addr %s691, 128
          %s693 = scalar_lea.hbm %s7, %s692
          %s695 = sshll.u32 %s684, 4
          %s696 = int_to_ptr.vmem [resolvable:$true] %s695
          %698 = dma.vmem_to_hbm [thread:$0]  %s696, 256, %s693, %s681
        $region52: #{tpu_custom_call.1} parent=47 // pred_fallthru
          _
      $region48: #{tpu_custom_call.1} parent=5 // pred_fallthru
        _
      %p699 = scmp.le.s32.totalorder 2, %s16
      // Predicated region
      $region53: #{tpu_custom_call.1} parent=5 // pred_check
        %p700 = pneg %p699
      $region54: #{tpu_custom_call.1} parent=5 // pred_check_branch
        %702 = sbr.rel (%p700) target = $region56
      $region55: #{tpu_custom_call.1} parent=5 // pred_region
        %s703 = ssub.s32 %s16, 2
        // Predicated region
        $region57: #{tpu_custom_call.1} parent=55 // pred_check
          %p704 = pneg %p197
        $region58: #{tpu_custom_call.1} parent=55 // pred_check_branch
          %706 = sbr.rel (%p704) target = $region60
        $region59: #{tpu_custom_call.1} parent=55 // pred_region
          %s707 = sand.u32 %s182, 1
          %s708 = scalar_lea.sflag [#allocation4], %s707
          %s709 = sand.u32 %s182, 1
          %s710 = smul.addr %s709, 16
          %s711 = scalar_lea.vmem [#allocation3], %s710
          %712 = dma.done %s708, 256
        $region60: #{tpu_custom_call.1} parent=55 // pred_fallthru
          _
      $region56: #{tpu_custom_call.1} parent=5 // pred_fallthru
        _
    $region6: #{tpu_custom_call.1} parent=1 // loop_footer
      %s20 = sadd.s32 1, %s16
    $region7: #{tpu_custom_call.1} parent=1 // loop_footer_branch
      %15 = sbr.rel target = $region3
    $region8: #{tpu_custom_call.1} parent=1 // loop_exit
      _
    %713 = vsyncpa [#allocation4], 1
    %s714 = scalar_lea.sflag [#allocation4], 1
    %715 = vsyncpa %s714, 1

</llo_original>
